<compile_context>
chip_gen: v6e
topology: v6e:2x2x1
jax: 0.10.0
libtpu: 0.0.40
codegen_flags: <defaults>
</compile_context>

<pallas_src>
import jax
import jax.numpy as jnp
from jax.experimental import pallas as pl
from jax.experimental.pallas import tpu as pltpu

_LANE = 128        # f32 lane width of a vreg
_BATCH_ALIGN = 16  # covers bf16 (16,128) packing and f32 (8,128)


def _round_up(x, m):
    return ((x + m - 1) // m) * m


def qnetwork_kernel(x_ref, w0_ref, b0_ref, w1_ref, b1_ref, w2_ref, b2_ref,
                    out_ref):
    """Fused 3-layer MLP: bf16 (or f32) MXU inputs, f32 accumulate/bias/ReLU."""
    wdt = w0_ref.dtype  # compute dtype of the MXU inputs (bf16 by default)

    # Layer 0 + ReLU  (x already cast to wdt in the wrapper)
    h = jnp.dot(x_ref[...], w0_ref[...], preferred_element_type=jnp.float32)
    h = jnp.maximum(h + b0_ref[...], 0.0)

    # Layer 1 + ReLU  (cast down only at the MXU input; VPU work stays f32)
    h = jnp.dot(h.astype(wdt), w1_ref[...], preferred_element_type=jnp.float32)
    h = jnp.maximum(h + b1_ref[...], 0.0)

    # Layer 2 (no activation — popped in the PyTorch module)
    q = jnp.dot(h.astype(wdt), w2_ref[...], preferred_element_type=jnp.float32)
    out_ref[...] = (q + b2_ref[...]).astype(out_ref.dtype)


def prepare_params(params, compute_dtype=jnp.bfloat16):
    """One-time weight prep (do this OUTSIDE the inference loop / jit).

    Transposes PyTorch (out, in) weights to (in, out), lane-pads only the
    hidden dims (state K-dim and action output dim are left unpadded), casts
    weights to the MXU compute dtype and keeps biases in f32.
    """
    w0, b0 = params["w0"], params["b0"]
    w1, b1 = params["w1"], params["b1"]
    w2, b2 = params["w2"], params["b2"]

    S = w0.shape[1]
    H0, H1, A = w0.shape[0], w1.shape[0], w2.shape[0]
    H0_p = _round_up(H0, _LANE)
    H1_p = _round_up(H1, _LANE)

    def pad_t(w, rows, cols):
        wt = w.T.astype(compute_dtype)
        return jnp.pad(wt, ((0, rows - wt.shape[0]), (0, cols - wt.shape[1])))

    return {
        "w0t": pad_t(w0, S, H0_p),       # (S,    H0_p)  K left unpadded
        "b0p": jnp.pad(b0.astype(jnp.float32), (0, H0_p - H0)).reshape(1, H0_p),
        "w1t": pad_t(w1, H0_p, H1_p),    # (H0_p, H1_p)
        "b1p": jnp.pad(b1.astype(jnp.float32), (0, H1_p - H1)).reshape(1, H1_p),
        "w2t": pad_t(w2, H1_p, A),       # (H1_p, A)     output lanes unpadded
        "b2p": b2.astype(jnp.float32).reshape(1, A),
    }


def qnetwork_forward(state, prep, *, batch_tile=2048):
    """Run the fused QNetwork kernel.

    state: (B, state_size) float32
    prep:  output of prepare_params()
    returns (B, action_size) float32 Q-values.
    """
    w0t, b0p = prep["w0t"], prep["b0p"]
    w1t, b1p = prep["w1t"], prep["b1p"]
    w2t, b2p = prep["w2t"], prep["b2p"]

    B, S = state.shape
    A = w2t.shape[1]

    # Batch tiling: big tiles to amortize per-grid-step overhead, but at
    # least 2 grid steps when the batch allows so v7x's two TensorCores both
    # get work (dimension_semantics=("parallel",)).
    B_min = _round_up(B, _BATCH_ALIGN)
    tb = min(_round_up(min(batch_tile, B_min), _BATCH_ALIGN), 8192)
    if B_min > _BATCH_ALIGN and B_min <= tb:
        tb = _round_up((B_min + 1) // 2, _BATCH_ALIGN)
    B_p = _round_up(B_min, tb)

    x = state.astype(w0t.dtype)
    if B_p != B:
        x = jnp.pad(x, ((0, B_p - B), (0, 0)))  # rows only; no lane padding

    grid = (B_p // tb,)

    # Weights / biases: full-array blocks with a constant block index so they
    # are DMA'd once and stay VMEM-resident across all batch tiles.
    def resident(a):
        return pl.BlockSpec(a.shape, lambda i: (0,) * a.ndim)

    out_p = pl.pallas_call(
        qnetwork_kernel,
        out_shape=jax.ShapeDtypeStruct((B_p, A), jnp.float32),
        grid=grid,
        in_specs=[
            pl.BlockSpec((tb, S), lambda i: (i, 0)),   # activations: tiled
            resident(w0t), resident(b0p),
            resident(w1t), resident(b1p),
            resident(w2t), resident(b2p),
        ],
        out_specs=pl.BlockSpec((tb, A), lambda i: (i, 0)),
        compiler_params=pltpu.CompilerParams(
            dimension_semantics=("parallel",)),
    )(x, w0t, b0p, w1t, b1p, w2t, b2p)

    return out_p[:B] if B_p != B else out_p


def init_qnetwork_params(key, state_size, action_size, hidden_layers):
    """Deterministic init mimicking nn.Linear default (uniform +/-1/sqrt(fan_in))."""
    sizes = [state_size] + list(hidden_layers) + [action_size]
    params = {}
    for idx, (fan_in, fan_out) in enumerate(zip(sizes[:-1], sizes[1:])):
        key, kw, kb = jax.random.split(key, 3)
        bound = 1.0 / (fan_in ** 0.5)
        params[f"w{idx}"] = jax.random.uniform(
            kw, (fan_out, fan_in), jnp.float32, -bound, bound)
        params[f"b{idx}"] = jax.random.uniform(
            kb, (fan_out,), jnp.float32, -bound, bound)
    return params


def qnetwork_reference_f32(state, params):
    """Exact f32 reference (matches the PyTorch module's math)."""
    h = jnp.maximum(state @ params["w0"].T + params["b0"], 0.0)
    h = jnp.maximum(h @ params["w1"].T + params["b1"], 0.0)
    return h @ params["w2"].T + params["b2"]


def qnetwork_reference_mixed(state, params, dtype):
    """Reference mirroring the kernel's numerics (dtype inputs, f32 accumulate)."""
    x = state.astype(dtype)
    h = jnp.dot(x, params["w0"].T.astype(dtype),
                preferred_element_type=jnp.float32)
    h = jnp.maximum(h + params["b0"], 0.0)
    h = jnp.dot(h.astype(dtype), params["w1"].T.astype(dtype),
                preferred_element_type=jnp.float32)
    h = jnp.maximum(h + params["b1"], 0.0)
    q = jnp.dot(h.astype(dtype), params["w2"].T.astype(dtype),
                preferred_element_type=jnp.float32)
    return q + params["b2"]


if __name__ == "__main__":
    # Small shapes consistent with the module's forward.
    state_size = 8
    action_size = 4
    hidden_layers = [32, 32]
    compute_dtype = jnp.bfloat16

    key = jax.random.PRNGKey(0)
    params = init_qnetwork_params(key, state_size, action_size, hidden_layers)

    # One-time weight preparation (hoisted out of the forward / jit).
    prepared = prepare_params(params, compute_dtype)

    fwd = jax.jit(qnetwork_forward)

    ok = True
    for batch in (2, 20):  # 20 exercises row padding + the 2-step parallel grid
        key, kx = jax.random.split(key)
        state = jax.random.normal(kx, (batch, state_size), jnp.float32)

        q = jax.block_until_ready(fwd(state, prepared))
        assert q.shape == (batch, action_size)

        q_mirror = qnetwork_reference_mixed(state, params, compute_dtype)
        q_f32 = qnetwork_reference_f32(state, params)

        ok &= bool(jnp.allclose(q, q_mirror, atol=1e-3, rtol=1e-3))
        ok &= bool(jnp.allclose(q, q_f32, atol=5e-2, rtol=5e-2))

    assert ok, "mismatch vs reference"
    print("KERNEL_OK")
</pallas_src>

<mosaic_0001>
module attributes {stable_mosaic.version = 11 : i64} {
  func.func @qnetwork_kernel(%arg0: i32, %arg1: memref<16x8xbf16, #tpu.memory_space<vmem>>, %arg2: memref<8x128xbf16, #tpu.memory_space<vmem>>, %arg3: memref<1x128xf32, #tpu.memory_space<vmem>>, %arg4: memref<128x128xbf16, #tpu.memory_space<vmem>>, %arg5: memref<1x128xf32, #tpu.memory_space<vmem>>, %arg6: memref<128x4xbf16, #tpu.memory_space<vmem>>, %arg7: memref<1x4xf32, #tpu.memory_space<vmem>>, %arg8: memref<16x4xf32, #tpu.memory_space<vmem>>) attributes {dimension_semantics = [#tpu.dimension_semantics<parallel>], iteration_bounds = array<i64: 1>, scalar_prefetch = 0 : i64, scratch_operands = 0 : i64, tpu.core_type = #tpu.core_type<tc>, window_params = [{transform_indices = @transform_0, window_bounds = array<i64: 16, 8>}, {pipeline_mode = #tpu.pipeline_mode<synchronous>, transform_indices = @transform_1, window_bounds = array<i64: 8, 128>}, {pipeline_mode = #tpu.pipeline_mode<synchronous>, transform_indices = @transform_2, window_bounds = array<i64: 1, 128>}, {pipeline_mode = #tpu.pipeline_mode<synchronous>, transform_indices = @transform_3, window_bounds = array<i64: 128, 128>}, {pipeline_mode = #tpu.pipeline_mode<synchronous>, transform_indices = @transform_4, window_bounds = array<i64: 1, 128>}, {pipeline_mode = #tpu.pipeline_mode<synchronous>, transform_indices = @transform_5, window_bounds = array<i64: 128, 4>}, {pipeline_mode = #tpu.pipeline_mode<synchronous>, transform_indices = @transform_6, window_bounds = array<i64: 1, 4>}, {transform_indices = @transform_7, window_bounds = array<i64: 16, 4>}]} {
    %c0 = arith.constant 0 : index
    %c0_0 = arith.constant 0 : index
    %0 = vector.load %arg1[%c0, %c0_0] : memref<16x8xbf16, #tpu.memory_space<vmem>>, vector<16x8xbf16>
    %c0_1 = arith.constant 0 : index
    %c0_2 = arith.constant 0 : index
    %1 = vector.load %arg2[%c0_1, %c0_2] : memref<8x128xbf16, #tpu.memory_space<vmem>>, vector<8x128xbf16>
    %cst = arith.constant dense<0.000000e+00> : vector<16x128xf32>
    %2 = tpu.matmul %0, %1, %cst {dimension_numbers = #tpu.dot_dimension_numbers<[1], [0], [0], [1], [0, 0, 1, 1], [], []>} : vector<16x8xbf16>, vector<8x128xbf16>, vector<16x128xf32> -> vector<16x128xf32>
    %c0_3 = arith.constant 0 : index
    %c0_4 = arith.constant 0 : index
    %3 = vector.load %arg3[%c0_3, %c0_4] : memref<1x128xf32, #tpu.memory_space<vmem>>, vector<1x128xf32>
    %4 = vector.broadcast %3 : vector<1x128xf32> to vector<16x128xf32>
    %5 = arith.addf %2, %4 : vector<16x128xf32>
    %cst_5 = arith.constant 0.000000e+00 : f32
    %6 = vector.broadcast %cst_5 : f32 to vector<16x128xf32>
    %7 = arith.maximumf %5, %6 : vector<16x128xf32>
    %8 = arith.truncf %7 : vector<16x128xf32> to vector<16x128xbf16>
    %c0_6 = arith.constant 0 : index
    %c0_7 = arith.constant 0 : index
    %9 = vector.load %arg4[%c0_6, %c0_7] : memref<128x128xbf16, #tpu.memory_space<vmem>>, vector<128x128xbf16>
    %cst_8 = arith.constant dense<0.000000e+00> : vector<16x128xf32>
    %10 = tpu.matmul %8, %9, %cst_8 {dimension_numbers = #tpu.dot_dimension_numbers<[1], [0], [0], [1], [0, 0, 1, 1], [], []>} : vector<16x128xbf16>, vector<128x128xbf16>, vector<16x128xf32> -> vector<16x128xf32>
    %c0_9 = arith.constant 0 : index
    %c0_10 = arith.constant 0 : index
    %11 = vector.load %arg5[%c0_9, %c0_10] : memref<1x128xf32, #tpu.memory_space<vmem>>, vector<1x128xf32>
    %12 = vector.broadcast %11 : vector<1x128xf32> to vector<16x128xf32>
    %13 = arith.addf %10, %12 : vector<16x128xf32>
    %cst_11 = arith.constant 0.000000e+00 : f32
    %14 = vector.broadcast %cst_11 : f32 to vector<16x128xf32>
    %15 = arith.maximumf %13, %14 : vector<16x128xf32>
    %16 = arith.truncf %15 : vector<16x128xf32> to vector<16x128xbf16>
    %c0_12 = arith.constant 0 : index
    %c0_13 = arith.constant 0 : index
    %17 = vector.load %arg6[%c0_12, %c0_13] : memref<128x4xbf16, #tpu.memory_space<vmem>>, vector<128x4xbf16>
    %cst_14 = arith.constant dense<0.000000e+00> : vector<16x4xf32>
    %18 = tpu.matmul %16, %17, %cst_14 {dimension_numbers = #tpu.dot_dimension_numbers<[1], [0], [0], [1], [0, 0, 1, 1], [], []>} : vector<16x128xbf16>, vector<128x4xbf16>, vector<16x4xf32> -> vector<16x4xf32>
    %c0_15 = arith.constant 0 : index
    %c0_16 = arith.constant 0 : index
    %19 = vector.load %arg7[%c0_15, %c0_16] : memref<1x4xf32, #tpu.memory_space<vmem>>, vector<1x4xf32>
    %20 = vector.broadcast %19 : vector<1x4xf32> to vector<16x4xf32>
    %21 = arith.addf %18, %20 : vector<16x4xf32>
    %c0_17 = arith.constant 0 : index
    %c0_18 = arith.constant 0 : index
    %22 = vector.load %arg8[%c0_17, %c0_18] : memref<16x4xf32, #tpu.memory_space<vmem>>, vector<16x4xf32>
    tpu.vector_store %arg8[%c0_17, %c0_18], %21 {strides = array<i32>} : memref<16x4xf32, #tpu.memory_space<vmem>>, vector<16x4xf32>,
    return
  }
  func.func @transform_0(%arg0: i32) -> (i32, i32) {
    %c0_i32 = arith.constant 0 : i32
    %c0_i32_0 = arith.constant 0 : i32
    return %arg0, %c0_i32 : i32, i32
  }
  func.func @transform_1(%arg0: i32) -> (i32, i32) {
    %c0_i32 = arith.constant 0 : i32
    %c0_i32_0 = arith.constant 0 : i32
    %c0_i32_1 = arith.constant 0 : i32
    return %c0_i32, %c0_i32_0 : i32, i32
  }
  func.func @transform_2(%arg0: i32) -> (i32, i32) {
    %c0_i32 = arith.constant 0 : i32
    %c0_i32_0 = arith.constant 0 : i32
    %c0_i32_1 = arith.constant 0 : i32
    return %c0_i32, %c0_i32_0 : i32, i32
  }
  func.func @transform_3(%arg0: i32) -> (i32, i32) {
    %c0_i32 = arith.constant 0 : i32
    %c0_i32_0 = arith.constant 0 : i32
    %c0_i32_1 = arith.constant 0 : i32
    return %c0_i32, %c0_i32_0 : i32, i32
  }
  func.func @transform_4(%arg0: i32) -> (i32, i32) {
    %c0_i32 = arith.constant 0 : i32
    %c0_i32_0 = arith.constant 0 : i32
    %c0_i32_1 = arith.constant 0 : i32
    return %c0_i32, %c0_i32_0 : i32, i32
  }
  func.func @transform_5(%arg0: i32) -> (i32, i32) {
    %c0_i32 = arith.constant 0 : i32
    %c0_i32_0 = arith.constant 0 : i32
    %c0_i32_1 = arith.constant 0 : i32
    return %c0_i32, %c0_i32_0 : i32, i32
  }
  func.func @transform_6(%arg0: i32) -> (i32, i32) {
    %c0_i32 = arith.constant 0 : i32
    %c0_i32_0 = arith.constant 0 : i32
    %c0_i32_1 = arith.constant 0 : i32
    return %c0_i32, %c0_i32_0 : i32, i32
  }
  func.func @transform_7(%arg0: i32) -> (i32, i32) {
    %c0_i32 = arith.constant 0 : i32
    %c0_i32_0 = arith.constant 0 : i32
    return %arg0, %c0_i32 : i32, i32
  }
}

</mosaic_0001>

<llo_original>
// kernel: qnetwork_forward.1
$region0: #{qnetwork_forward.1}
  #allocation0 [shape = 'u32[]', space=smem, size = 0x4, offset = 0x4, fixed_abs, tag = 'smem constant byte address 0x4 - core index']
  #allocation1 [shape = 'u32[144,128]{1,0:T(1,128)}', space=vmem, size = 0x12000, scoped, tag = 'internal scratch']
  %s0 = inlined_call_operand.vmem [shape: bf16[16,8], index: 0, kind: input, shape index: {}]
  %s1 = inlined_call_operand.vmem [shape: bf16[8,128], index: 1, kind: input, shape index: {}]
  %s2 = inlined_call_operand.vmem [shape: f32[1,128], index: 2, kind: input, shape index: {}]
  %s3 = inlined_call_operand.vmem [shape: bf16[128,128], index: 3, kind: input, shape index: {}]
  %s4 = inlined_call_operand.vmem [shape: f32[1,128], index: 4, kind: input, shape index: {}]
  %s5 = inlined_call_operand.vmem [shape: bf16[128,4], index: 5, kind: input, shape index: {}]
  %s6 = inlined_call_operand.vmem [shape: f32[1,4], index: 6, kind: input, shape index: {}]
  %s7 = inlined_call_operand.vmem [shape: f32[16,4], index: 7, kind: output, shape index: {}]
  %s8 = sld [smem:[#allocation0]]
  $region38: #{qnetwork_forward.1} parent=0
    _
  %s10 = ssub.s32 1, %s8
  %s11 = scalar_select 0, %s10, %s8
  // Predicated region
  $region2: #{qnetwork_forward.1} parent=0 // pred_check
    _
  $region3: #{qnetwork_forward.1} parent=0 // pred_check_branch
    %13 = sbr.rel (0) target = $region5
  $region4: #{qnetwork_forward.1} parent=0 // pred_region
    _
  $region5: #{qnetwork_forward.1} parent=0 // pred_fallthru
    _
  // Predicated region
  $region6: #{qnetwork_forward.1} parent=0 // pred_check
    _
  $region7: #{qnetwork_forward.1} parent=0 // pred_check_branch
    %15 = sbr.rel (0) target = $region9
  $region8: #{qnetwork_forward.1} parent=0 // pred_region
    _
  $region9: #{qnetwork_forward.1} parent=0 // pred_fallthru
    _
  // Predicated region
  $region10: #{qnetwork_forward.1} parent=0 // pred_check
    _
  $region11: #{qnetwork_forward.1} parent=0 // pred_check_branch
    %17 = sbr.rel (0) target = $region13
  $region12: #{qnetwork_forward.1} parent=0 // pred_region
    _
  $region13: #{qnetwork_forward.1} parent=0 // pred_fallthru
    _
  // Predicated region
  $region14: #{qnetwork_forward.1} parent=0 // pred_check
    _
  $region15: #{qnetwork_forward.1} parent=0 // pred_check_branch
    %19 = sbr.rel (0) target = $region17
  $region16: #{qnetwork_forward.1} parent=0 // pred_region
    _
  $region17: #{qnetwork_forward.1} parent=0 // pred_fallthru
    _
  // Predicated region
  $region18: #{qnetwork_forward.1} parent=0 // pred_check
    _
  $region19: #{qnetwork_forward.1} parent=0 // pred_check_branch
    %21 = sbr.rel (0) target = $region21
  $region20: #{qnetwork_forward.1} parent=0 // pred_region
    _
  $region21: #{qnetwork_forward.1} parent=0 // pred_fallthru
    _
  // Predicated region
  $region22: #{qnetwork_forward.1} parent=0 // pred_check
    _
  $region23: #{qnetwork_forward.1} parent=0 // pred_check_branch
    %23 = sbr.rel (0) target = $region25
  $region24: #{qnetwork_forward.1} parent=0 // pred_region
    _
  $region25: #{qnetwork_forward.1} parent=0 // pred_fallthru
    _
  // Predicated region
  $region26: #{qnetwork_forward.1} parent=0 // pred_check
    _
  $region27: #{qnetwork_forward.1} parent=0 // pred_check_branch
    %25 = sbr.rel (0) target = $region29
  $region28: #{qnetwork_forward.1} parent=0 // pred_region
    _
  $region29: #{qnetwork_forward.1} parent=0 // pred_fallthru
    _
  %v27 = vld [vmem:[%s0] sm:$0xf]
  %v28 = vld [vmem:[%s0 + $0x4] sm:$0xf]
  %v29 = vld [vmem:[%s1] sm:$0xf]
  %v30 = vld [vmem:[%s2] sm:$0x1]
  %v32 = vlaneseq
  %v33 = vshrl.u32 %v32, 7
  %v34 = vsub.s32 0, %v33
  %v35 = vrot.slane %v30, %v34
  %v39 = vunpack.c.l.b16 %v27
  %v40 = vunpack.c.l.b16 %v28
  %v41 = vpack.c.b16 %v40, %v39
  %vm42 = vcmask 64512
  %v44 = vsel %vm42, %v41, 0
  %vm46 = vcmask 1043456
  %v48 = vsel %vm46, %v29, 0
  %50 = vmatprep.subr.bf16.mxu0 0
  %51 = vmatpush1.bf16.msra.mxu0 0
  %52 = vmatprep.subr.bf16.mxu0 0
  %53 = vmatpush1.bf16.msra.mxu0 0
  %54 = vmatprep.subr.bf16.mxu0 0
  %55 = vmatpush1.bf16.msra.mxu0 0
  %56 = vmatprep.subr.bf16.mxu0 0
  %57 = vmatpush1.bf16.msra.mxu0 0
  %58 = vmatprep.subr.bf16.mxu0 0
  %59 = vmatpush1.bf16.msra.mxu0 0
  %60 = vmatprep.subr.bf16.mxu0 0
  %61 = vmatpush1.bf16.msra.mxu0 0
  %62 = vmatprep.subr.bf16.mxu0 0
  %63 = vmatpush1.bf16.msra.mxu0 0
  %64 = vmatprep.subr.bf16.mxu0 0
  %65 = vmatpush1.bf16.msra.mxu0 %v48
  %66 = vmatprep.subr.bf16.mxu0 0
  %67 = vmatpush2.bf16.msra.mxu0 0
  %68 = vmatprep.subr.bf16.mxu0 0
  %69 = vmatpush2.bf16.msra.mxu0 0
  %70 = vmatprep.subr.bf16.mxu0 0
  %71 = vmatpush2.bf16.msra.mxu0 0
  %72 = vmatprep.subr.bf16.mxu0 0
  %73 = vmatpush2.bf16.msra.mxu0 0
  %74 = vmatprep.subr.bf16.mxu0 0
  %75 = vmatpush2.bf16.msra.mxu0 0
  %76 = vmatprep.subr.bf16.mxu0 0
  %77 = vmatpush2.bf16.msra.mxu0 0
  %78 = vmatprep.subr.bf16.mxu0 0
  %79 = vmatpush2.bf16.msra.mxu0 0
  %80 = vmatprep.subr.bf16.mxu0 0
  %81 = vmatpush2.bf16.msra.mxu0 0
  %82 = vmatprep.mubr.bf16.mxu0 0
  %83 = vmatmul.mubr.bf16.gmra.mxu0 %v44
  %v84 = vpop.f32.mrf.mxu0
  %v85 = vadd.f32 %v35, %v84
  %v86 = vpop.f32.mrf.mxu0
  %v87 = vpop.f32.mrf.mxu0
  %v88 = vadd.f32 %v35, %v87
  %v89 = vpop.f32.mrf.mxu0
  %90 = vdwg.mxu0
  %v91 = vmax.f32 %v85, 0.0
  %v92 = vmax.f32 %v88, 0.0
  %v93 = vpack.c.bf16 %v92, %v91
  %v94 = vld [vmem:[%s3] sm:$0xf]
  %v95 = vld [vmem:[%s3 + $0x4] sm:$0xf]
  %v96 = vld [vmem:[%s3 + $0x8] sm:$0xf]
  %v97 = vld [vmem:[%s3 + $0xc] sm:$0xf]
  %v98 = vld [vmem:[%s3 + $0x10] sm:$0xf]
  %v99 = vld [vmem:[%s3 + $0x14] sm:$0xf]
  %v100 = vld [vmem:[%s3 + $0x18] sm:$0xf]
  %v101 = vld [vmem:[%s3 + $0x1c] sm:$0xf]
  %v102 = vld [vmem:[%s3 + $0x20] sm:$0xf]
  %v103 = vld [vmem:[%s3 + $0x24] sm:$0xf]
  %v104 = vld [vmem:[%s3 + $0x28] sm:$0xf]
  %v105 = vld [vmem:[%s3 + $0x2c] sm:$0xf]
  %v106 = vld [vmem:[%s3 + $0x30] sm:$0xf]
  %v107 = vld [vmem:[%s3 + $0x34] sm:$0xf]
  %v108 = vld [vmem:[%s3 + $0x38] sm:$0xf]
  %v109 = vld [vmem:[%s3 + $0x3c] sm:$0xf]
  %v110 = vld [vmem:[%s4] sm:$0x1]
  %v112 = vlaneseq
  %v113 = vshrl.u32 %v112, 7
  %v114 = vsub.s32 0, %v113
  %v115 = vrot.slane %v110, %v114
  %v133 = vunpack.c.l.b16 %v94
  %v134 = vunpack.c.l.b16 %v95
  %v135 = vunpack.c.l.b16 %v96
  %v136 = vunpack.c.l.b16 %v97
  %v137 = vunpack.c.l.b16 %v98
  %v138 = vunpack.c.l.b16 %v99
  %v139 = vunpack.c.l.b16 %v100
  %v140 = vunpack.c.l.b16 %v101
  %v141 = vunpack.c.l.b16 %v102
  %v142 = vunpack.c.l.b16 %v103
  %v143 = vunpack.c.l.b16 %v104
  %v144 = vunpack.c.l.b16 %v105
  %v145 = vunpack.c.l.b16 %v106
  %v146 = vunpack.c.l.b16 %v107
  %v147 = vunpack.c.l.b16 %v108
  %v148 = vunpack.c.l.b16 %v109
  %v149 = vpack.c.b16 %v134, %v133
  %v150 = vpack.c.b16 %v136, %v135
  %v151 = vpack.c.b16 %v138, %v137
  %v152 = vpack.c.b16 %v140, %v139
  %v153 = vpack.c.b16 %v142, %v141
  %v154 = vpack.c.b16 %v144, %v143
  %v155 = vpack.c.b16 %v146, %v145
  %v156 = vpack.c.b16 %v148, %v147
  %165 = vmatprep.subr.bf16.mxu0 0
  %166 = vmatpush1.bf16.msra.mxu0 %v156
  %167 = vmatprep.subr.bf16.mxu0 0
  %168 = vmatpush1.bf16.msra.mxu0 %v155
  %169 = vmatprep.subr.bf16.mxu0 0
  %170 = vmatpush1.bf16.msra.mxu0 %v154
  %171 = vmatprep.subr.bf16.mxu0 0
  %172 = vmatpush1.bf16.msra.mxu0 %v153
  %173 = vmatprep.subr.bf16.mxu0 0
  %174 = vmatpush1.bf16.msra.mxu0 %v152
  %175 = vmatprep.subr.bf16.mxu0 0
  %176 = vmatpush1.bf16.msra.mxu0 %v151
  %177 = vmatprep.subr.bf16.mxu0 0
  %178 = vmatpush1.bf16.msra.mxu0 %v150
  %179 = vmatprep.subr.bf16.mxu0 0
  %180 = vmatpush1.bf16.msra.mxu0 %v149
  %181 = vmatprep.subr.bf16.mxu0 0
  %182 = vmatpush2.bf16.msra.mxu0 0
  %183 = vmatprep.subr.bf16.mxu0 0
  %184 = vmatpush2.bf16.msra.mxu0 0
  %185 = vmatprep.subr.bf16.mxu0 0
  %186 = vmatpush2.bf16.msra.mxu0 0
  %187 = vmatprep.subr.bf16.mxu0 0
  %188 = vmatpush2.bf16.msra.mxu0 0
  %189 = vmatprep.subr.bf16.mxu0 0
  %190 = vmatpush2.bf16.msra.mxu0 0
  %191 = vmatprep.subr.bf16.mxu0 0
  %192 = vmatpush2.bf16.msra.mxu0 0
  %193 = vmatprep.subr.bf16.mxu0 0
  %194 = vmatpush2.bf16.msra.mxu0 0
  %195 = vmatprep.subr.bf16.mxu0 0
  %196 = vmatpush2.bf16.msra.mxu0 0
  %197 = vmatprep.mubr.bf16.mxu0 0
  %198 = vmatmul.mubr.bf16.gmra.mxu0 %v93
  %v199 = vpop.f32.mrf.mxu0
  %v200 = vadd.f32 %v115, %v199
  %v201 = vpop.f32.mrf.mxu0
  %v202 = vpop.f32.mrf.mxu0
  %v203 = vadd.f32 %v115, %v202
  %v204 = vpop.f32.mrf.mxu0
  %205 = vdwg.mxu0
  %v206 = vmax.f32 %v200, 0.0
  %v207 = vmax.f32 %v203, 0.0
  %v208 = vpack.c.bf16 %v207, %v206
  %v209 = vld [vmem:[%s5] sm:$0xf]
  %v210 = vld [vmem:[%s5 + $0x4] sm:$0xf]
  %v211 = vld [vmem:[%s5 + $0x8] sm:$0xf]
  %v212 = vld [vmem:[%s5 + $0xc] sm:$0xf]
  %v213 = vld [vmem:[%s5 + $0x10] sm:$0xf]
  %v214 = vld [vmem:[%s5 + $0x14] sm:$0xf]
  %v215 = vld [vmem:[%s5 + $0x18] sm:$0xf]
  %v216 = vld [vmem:[%s5 + $0x1c] sm:$0xf]
  %v217 = vld [vmem:[%s5 + $0x20] sm:$0xf]
  %v218 = vld [vmem:[%s5 + $0x24] sm:$0xf]
  %v219 = vld [vmem:[%s5 + $0x28] sm:$0xf]
  %v220 = vld [vmem:[%s5 + $0x2c] sm:$0xf]
  %v221 = vld [vmem:[%s5 + $0x30] sm:$0xf]
  %v222 = vld [vmem:[%s5 + $0x34] sm:$0xf]
  %v223 = vld [vmem:[%s5 + $0x38] sm:$0xf]
  %v224 = vld [vmem:[%s5 + $0x3c] sm:$0xf]
  %v225 = vld [vmem:[%s6] sm:$0x1]
  %v227 = vlaneseq
  %v228 = vshrl.u32 %v227, 7
  %v229 = vsub.s32 0, %v228
  %v230 = vrot.slane %v225, %v229
  %v248 = vunpack.c.l.b16 %v209
  %v249 = vunpack.c.l.b16 %v210
  %v250 = vunpack.c.l.b16 %v211
  %v251 = vunpack.c.l.b16 %v212
  %v252 = vunpack.c.l.b16 %v213
  %v253 = vunpack.c.l.b16 %v214
  %v254 = vunpack.c.l.b16 %v215
  %v255 = vunpack.c.l.b16 %v216
  %v256 = vunpack.c.l.b16 %v217
  %v257 = vunpack.c.l.b16 %v218
  %v258 = vunpack.c.l.b16 %v219
  %v259 = vunpack.c.l.b16 %v220
  %v260 = vunpack.c.l.b16 %v221
  %v261 = vunpack.c.l.b16 %v222
  %v262 = vunpack.c.l.b16 %v223
  %v263 = vunpack.c.l.b16 %v224
  %v264 = vpack.c.b16 %v249, %v248
  %v265 = vpack.c.b16 %v251, %v250
  %v266 = vpack.c.b16 %v253, %v252
  %v267 = vpack.c.b16 %v255, %v254
  %v268 = vpack.c.b16 %v257, %v256
  %v269 = vpack.c.b16 %v259, %v258
  %v270 = vpack.c.b16 %v261, %v260
  %v271 = vpack.c.b16 %v263, %v262
  %280 = vmatprep.subr.bf16.mxu0 0
  %281 = vmatpush1.bf16.msra.mxu0 %v271
  %282 = vmatprep.subr.bf16.mxu0 0
  %283 = vmatpush1.bf16.msra.mxu0 %v270
  %284 = vmatprep.subr.bf16.mxu0 0
  %285 = vmatpush1.bf16.msra.mxu0 %v269
  %286 = vmatprep.subr.bf16.mxu0 0
  %287 = vmatpush1.bf16.msra.mxu0 %v268
  %288 = vmatprep.subr.bf16.mxu0 0
  %289 = vmatpush1.bf16.msra.mxu0 %v267
  %290 = vmatprep.subr.bf16.mxu0 0
  %291 = vmatpush1.bf16.msra.mxu0 %v266
  %292 = vmatprep.subr.bf16.mxu0 0
  %293 = vmatpush1.bf16.msra.mxu0 %v265
  %294 = vmatprep.subr.bf16.mxu0 0
  %295 = vmatpush1.bf16.msra.mxu0 %v264
  %296 = vmatprep.subr.bf16.mxu0 0
  %297 = vmatpush2.bf16.msra.mxu0 0
  %298 = vmatprep.subr.bf16.mxu0 0
  %299 = vmatpush2.bf16.msra.mxu0 0
  %300 = vmatprep.subr.bf16.mxu0 0
  %301 = vmatpush2.bf16.msra.mxu0 0
  %302 = vmatprep.subr.bf16.mxu0 0
  %303 = vmatpush2.bf16.msra.mxu0 0
  %304 = vmatprep.subr.bf16.mxu0 0
  %305 = vmatpush2.bf16.msra.mxu0 0
  %306 = vmatprep.subr.bf16.mxu0 0
  %307 = vmatpush2.bf16.msra.mxu0 0
  %308 = vmatprep.subr.bf16.mxu0 0
  %309 = vmatpush2.bf16.msra.mxu0 0
  %310 = vmatprep.subr.bf16.mxu0 0
  %311 = vmatpush2.bf16.msra.mxu0 0
  %312 = vmatprep.mubr.bf16.mxu0 0
  %313 = vmatmul.mubr.bf16.gmra.mxu0 %v208
  %v314 = vpop.f32.mrf.mxu0
  %v315 = vadd.f32 %v230, %v314
  %v316 = vpop.f32.mrf.mxu0
  %v317 = vpop.f32.mrf.mxu0
  %v318 = vadd.f32 %v230, %v317
  %v319 = vpop.f32.mrf.mxu0
  %320 = vdwg.mxu0
  %vm321 = vcmask 31744
  %322 = vst.msk [vmem:[%s7] sm:$0xff] %vm321, %v315
  %323 = vst.msk [vmem:[%s7 + $0x8] sm:$0xff] %vm321, %v318
  // Predicated region
  $region30: #{qnetwork_forward.1} parent=0 // pred_check
    _
  $region31: #{qnetwork_forward.1} parent=0 // pred_check_branch
    %325 = sbr.rel (0) target = $region33
  $region32: #{qnetwork_forward.1} parent=0 // pred_region
    _
  $region33: #{qnetwork_forward.1} parent=0 // pred_fallthru
    _
  // Predicated region
  $region34: #{qnetwork_forward.1} parent=0 // pred_check
    _
  $region35: #{qnetwork_forward.1} parent=0 // pred_check_branch
    %327 = sbr.rel (0) target = $region37
  $region36: #{qnetwork_forward.1} parent=0 // pred_region
    _
  $region37: #{qnetwork_forward.1} parent=0 // pred_fallthru
    _

</llo_original>
